<compile_context>
chip_gen: v6e
topology: v6e:2x2x1
jax: 0.10.0
libtpu: 0.0.40
codegen_flags: <defaults>
</compile_context>

<pallas_src>
import numpy as np
import jax
import jax.numpy as jnp
from jax.experimental import pallas as pl
from jax.experimental.pallas import tpu as pltpu

DEFINING_LAYERS = 5
N_WIRES = 4
DIM = 2 ** N_WIRES          # 16
BLOCK_B = 256               # batch tile (lanes); keeps live (16,BT) f32 arrays in vregs


# ----------------------------------------------------------------------------
# Parameter / fixed-unitary setup (glue, plain numpy — done once)
# ----------------------------------------------------------------------------
def _u3(theta, phi, lam):
    ct, st = np.cos(theta / 2.0), np.sin(theta / 2.0)
    return np.array(
        [[ct, -np.exp(1j * lam) * st],
         [np.exp(1j * phi) * st, np.exp(1j * (phi + lam)) * ct]],
        dtype=np.complex128,
    )


def _cnot_full(control, target):
    # wire 0 is the most-significant bit (PennyLane default.qubit convention)
    u = np.zeros((DIM, DIM), dtype=np.complex128)
    for k in range(DIM):
        bits = [(k >> (N_WIRES - 1 - i)) & 1 for i in range(N_WIRES)]
        if bits[control] == 1:
            bits[target] ^= 1
        j = sum(b << (N_WIRES - 1 - i) for i, b in enumerate(bits))
        u[j, k] = 1.0
    return u


_RING_CNOTS = [_cnot_full(0, 1), _cnot_full(1, 2), _cnot_full(2, 3), _cnot_full(3, 0)]


def build_u_fixed(weights_np):
    """Product of all weight-layer gates + ring CNOTs (applied after encoding)."""
    u = np.eye(DIM, dtype=np.complex128)
    for l in range(weights_np.shape[0]):
        layer = _u3(*weights_np[l, 0])
        for i in range(1, N_WIRES):
            layer = np.kron(layer, _u3(*weights_np[l, i]))
        u = layer @ u
        for c in _RING_CNOTS:
            u = c @ u
    return u


def build_complex_as_real(u_fixed):
    """M = [[Ur, -Ui], [Ui, Ur]]  so  [fr; fi] = M @ [psi_r; psi_i]."""
    ur = u_fixed.real.astype(np.float32)
    ui = u_fixed.imag.astype(np.float32)
    top = np.concatenate([ur, -ui], axis=1)
    bot = np.concatenate([ui, ur], axis=1)
    return np.concatenate([top, bot], axis=0)          # (32, 32) f32


def build_sign_matrix():
    # signs[k, i] = +1 if bit of wire i in basis state k is 0, else -1
    s = np.zeros((DIM, N_WIRES), dtype=np.float32)
    for k in range(DIM):
        for i in range(N_WIRES):
            s[k, i] = 1.0 - 2.0 * ((k >> (N_WIRES - 1 - i)) & 1)
    return s


def build_bit_matrix():
    # bits[k, i] = 1.0 if bit of wire i in basis state k is 1, else 0.0
    b = np.zeros((DIM, N_WIRES), dtype=np.float32)
    for k in range(DIM):
        for i in range(N_WIRES):
            b[k, i] = float((k >> (N_WIRES - 1 - i)) & 1)
    return b


# ----------------------------------------------------------------------------
# Pallas kernel: encoding -> fused complex matmul -> |amp|^2 -> PauliZ reduction
# Layout: batch on lanes.  x:(4,BT)  state:(16,BT)/(32,BT)  out:(4,BT)
# ----------------------------------------------------------------------------
def quantum_kernel(x_ref, m_ref, signs_t_ref, bits_ref, out_ref):
    x = x_ref[...]                                   # (4, BT) f32
    bits = bits_ref[...]                             # (16, 4) f32

    psi_r = None
    psi_i = None
    for w in range(N_WIRES):
        theta = x[w:w + 1, :]                        # (1, BT)
        c = jnp.cos(0.5 * theta)                     # cos(t/2)
        s = jnp.sin(0.5 * theta)                     # sin(t/2)
        s2 = s * s
        # U3(t,t,t)|0> = [cos(t/2), e^{it} sin(t/2)]; double-angle identities:
        #   cos(t) = 1 - 2 s^2,  sin(t) = 2 s c
        a1r = (1.0 - 2.0 * s2) * s                   # Re of |1> amplitude
        a1i = 2.0 * s2 * c                           # Im of |1> amplitude
        bw = bits[:, w:w + 1]                        # (16, 1) — 1.0 where bit set
        amp_r = c + bw * (a1r - c)                   # (16, BT) arithmetic blend
        amp_i = bw * a1i                             # (16, BT)
        if psi_r is None:
            psi_r, psi_i = amp_r, amp_i
        else:
            psi_r, psi_i = (psi_r * amp_r - psi_i * amp_i,
                            psi_r * amp_i + psi_i * amp_r)

    # Fused complex evolution: [fr; fi] = M(32,32) @ [psi_r; psi_i](32,BT)
    state = jnp.concatenate([psi_r, psi_i], axis=0)              # (32, BT)
    final = jnp.dot(m_ref[...], state,
                    preferred_element_type=jnp.float32)          # (32, BT)
    fr = final[:DIM, :]
    fi = final[DIM:, :]
    probs = fr * fr + fi * fi                                    # (16, BT)

    # <PauliZ(i)> = signs^T (4,16) @ probs (16,BT)
    out_ref[...] = jnp.dot(signs_t_ref[...], probs,
                           preferred_element_type=jnp.float32)   # (4, BT)


def quantum_layer(x, m32, signs_t, bits, *, block_b=BLOCK_B):
    """x: (B, 4) f32 -> (B, 4) f32."""
    b = x.shape[0]
    bp = ((b + block_b - 1) // block_b) * block_b
    xt = jnp.transpose(x)                            # (4, B), batch on lanes
    if bp != b:
        xt = jnp.pad(xt, ((0, 0), (0, bp - b)))
    grid = (bp // block_b,)

    cost = pl.CostEstimate(
        flops=bp * (2 * (2 * DIM) * (2 * DIM) + 2 * DIM * N_WIRES + 40 * DIM),
        transcendentals=2 * N_WIRES * bp,
        bytes_accessed=4 * (2 * N_WIRES * bp + (2 * DIM) * (2 * DIM) + 2 * DIM * N_WIRES),
    )

    out_t = pl.pallas_call(
        quantum_kernel,
        out_shape=jax.ShapeDtypeStruct((N_WIRES, bp), jnp.float32),
        grid_spec=pltpu.PrefetchScalarGridSpec(
            num_scalar_prefetch=0,
            grid=grid,
            in_specs=[
                pl.BlockSpec((N_WIRES, block_b), lambda i: (0, i)),      # x tile
                pl.BlockSpec((2 * DIM, 2 * DIM), lambda i: (0, 0)),      # M (resident)
                pl.BlockSpec((N_WIRES, DIM), lambda i: (0, 0)),          # signs^T
                pl.BlockSpec((DIM, N_WIRES), lambda i: (0, 0)),          # bit table
            ],
            out_specs=pl.BlockSpec((N_WIRES, block_b), lambda i: (0, i)),
        ),
        compiler_params=pltpu.CompilerParams(
            dimension_semantics=("parallel",)),
        cost_estimate=cost,
    )(xt, m32, signs_t, bits)

    return jnp.transpose(out_t[:, :b])               # (B, 4)


# ----------------------------------------------------------------------------
# Pure-numpy reference (direct statevector simulation of the circuit)
# ----------------------------------------------------------------------------
def _apply_1q(gate, wire, psi):
    ops = [np.eye(2, dtype=np.complex128)] * N_WIRES
    ops[wire] = gate
    full = ops[0]
    for o in ops[1:]:
        full = np.kron(full, o)
    return full @ psi


def ref_forward(x_np, weights_np):
    signs = build_sign_matrix().astype(np.float64)
    outs = []
    for xi in x_np:
        psi = np.zeros(DIM, dtype=np.complex128)
        psi[0] = 1.0
        for i in range(N_WIRES):
            psi = _apply_1q(_u3(xi[i], xi[i], xi[i]), i, psi)
        for l in range(weights_np.shape[0]):
            for i in range(N_WIRES):
                psi = _apply_1q(_u3(*weights_np[l, i]), i, psi)
            for c in _RING_CNOTS:
                psi = c @ psi
        probs = np.abs(psi) ** 2
        outs.append(probs @ signs)
    return np.asarray(outs, dtype=np.float32)


# ----------------------------------------------------------------------------
if __name__ == "__main__":
    B = 8
    key_x, key_w = jax.random.split(jax.random.PRNGKey(0))

    # deterministic inputs and parameters (module: weights ~ randn(5, 4, 3))
    x = jax.random.normal(key_x, (B, N_WIRES), dtype=jnp.float32)
    weights = jax.random.normal(key_w, (DEFINING_LAYERS, N_WIRES, 3), dtype=jnp.float32)

    weights_np = np.asarray(weights, dtype=np.float64)
    u_fixed = build_u_fixed(weights_np)

    m32 = jnp.asarray(build_complex_as_real(u_fixed))        # (32, 32)
    signs_t = jnp.asarray(build_sign_matrix().T)             # (4, 16)
    bits = jnp.asarray(build_bit_matrix())                   # (16, 4)

    out = quantum_layer(x, m32, signs_t, bits)
    out = jax.block_until_ready(out)

    ref = ref_forward(np.asarray(x, dtype=np.float64), weights_np)
    np.testing.assert_allclose(np.asarray(out), ref, atol=1e-4, rtol=1e-4)

    print("KERNEL_OK")
</pallas_src>

<mosaic_0001>
module attributes {stable_mosaic.version = 11 : i64} {
  func.func @quantum_kernel(%arg0: i32, %arg1: memref<4x256xf32, #tpu.memory_space<vmem>>, %arg2: memref<32x32xf32, #tpu.memory_space<vmem>>, %arg3: memref<4x16xf32, #tpu.memory_space<vmem>>, %arg4: memref<16x4xf32, #tpu.memory_space<vmem>>, %arg5: memref<4x256xf32, #tpu.memory_space<vmem>>) attributes {dimension_semantics = [#tpu.dimension_semantics<parallel>], iteration_bounds = array<i64: 1>, scalar_prefetch = 0 : i64, scratch_operands = 0 : i64, tpu.core_type = #tpu.core_type<tc>, window_params = [{transform_indices = @transform_0, window_bounds = array<i64: 4, 256>}, {pipeline_mode = #tpu.pipeline_mode<synchronous>, transform_indices = @transform_1, window_bounds = array<i64: 32, 32>}, {pipeline_mode = #tpu.pipeline_mode<synchronous>, transform_indices = @transform_2, window_bounds = array<i64: 4, 16>}, {pipeline_mode = #tpu.pipeline_mode<synchronous>, transform_indices = @transform_3, window_bounds = array<i64: 16, 4>}, {transform_indices = @transform_4, window_bounds = array<i64: 4, 256>}]} {
    %c0 = arith.constant 0 : index
    %c0_0 = arith.constant 0 : index
    %0 = vector.load %arg1[%c0, %c0_0] : memref<4x256xf32, #tpu.memory_space<vmem>>, vector<4x256xf32>
    %c0_1 = arith.constant 0 : index
    %c0_2 = arith.constant 0 : index
    %1 = vector.load %arg4[%c0_1, %c0_2] : memref<16x4xf32, #tpu.memory_space<vmem>>, vector<16x4xf32>
    %2 = vector.extract_strided_slice %0 {offsets = [0, 0], sizes = [1, 256], strides = [1, 1]} : vector<4x256xf32> to vector<1x256xf32>
    %cst = arith.constant 5.000000e-01 : f32
    %3 = vector.broadcast %cst : f32 to vector<1x256xf32>
    %4 = arith.mulf %3, %2 : vector<1x256xf32>
    %5 = math.cos %4 : vector<1x256xf32>
    %cst_3 = arith.constant 5.000000e-01 : f32
    %6 = vector.broadcast %cst_3 : f32 to vector<1x256xf32>
    %7 = arith.mulf %6, %2 : vector<1x256xf32>
    %8 = math.sin %7 : vector<1x256xf32>
    %9 = arith.mulf %8, %8 : vector<1x256xf32>
    %cst_4 = arith.constant 2.000000e+00 : f32
    %10 = vector.broadcast %cst_4 : f32 to vector<1x256xf32>
    %11 = arith.mulf %10, %9 : vector<1x256xf32>
    %cst_5 = arith.constant 1.000000e+00 : f32
    %12 = vector.broadcast %cst_5 : f32 to vector<1x256xf32>
    %13 = arith.subf %12, %11 : vector<1x256xf32>
    %14 = arith.mulf %13, %8 : vector<1x256xf32>
    %cst_6 = arith.constant 2.000000e+00 : f32
    %15 = vector.broadcast %cst_6 : f32 to vector<1x256xf32>
    %16 = arith.mulf %15, %9 : vector<1x256xf32>
    %17 = arith.mulf %16, %5 : vector<1x256xf32>
    %18 = vector.extract_strided_slice %1 {offsets = [0, 0], sizes = [16, 1], strides = [1, 1]} : vector<16x4xf32> to vector<16x1xf32>
    %19 = arith.subf %14, %5 : vector<1x256xf32>
    %20 = vector.broadcast %18 : vector<16x1xf32> to vector<16x256xf32>
    %21 = vector.broadcast %19 : vector<1x256xf32> to vector<16x256xf32>
    %22 = arith.mulf %20, %21 : vector<16x256xf32>
    %23 = vector.broadcast %5 : vector<1x256xf32> to vector<16x256xf32>
    %24 = arith.addf %23, %22 : vector<16x256xf32>
    %25 = vector.broadcast %18 : vector<16x1xf32> to vector<16x256xf32>
    %26 = vector.broadcast %17 : vector<1x256xf32> to vector<16x256xf32>
    %27 = arith.mulf %25, %26 : vector<16x256xf32>
    %28 = vector.extract_strided_slice %0 {offsets = [1, 0], sizes = [1, 256], strides = [1, 1]} : vector<4x256xf32> to vector<1x256xf32>
    %cst_7 = arith.constant 5.000000e-01 : f32
    %29 = vector.broadcast %cst_7 : f32 to vector<1x256xf32>
    %30 = arith.mulf %29, %28 : vector<1x256xf32>
    %31 = math.cos %30 : vector<1x256xf32>
    %cst_8 = arith.constant 5.000000e-01 : f32
    %32 = vector.broadcast %cst_8 : f32 to vector<1x256xf32>
    %33 = arith.mulf %32, %28 : vector<1x256xf32>
    %34 = math.sin %33 : vector<1x256xf32>
    %35 = arith.mulf %34, %34 : vector<1x256xf32>
    %cst_9 = arith.constant 2.000000e+00 : f32
    %36 = vector.broadcast %cst_9 : f32 to vector<1x256xf32>
    %37 = arith.mulf %36, %35 : vector<1x256xf32>
    %cst_10 = arith.constant 1.000000e+00 : f32
    %38 = vector.broadcast %cst_10 : f32 to vector<1x256xf32>
    %39 = arith.subf %38, %37 : vector<1x256xf32>
    %40 = arith.mulf %39, %34 : vector<1x256xf32>
    %cst_11 = arith.constant 2.000000e+00 : f32
    %41 = vector.broadcast %cst_11 : f32 to vector<1x256xf32>
    %42 = arith.mulf %41, %35 : vector<1x256xf32>
    %43 = arith.mulf %42, %31 : vector<1x256xf32>
    %44 = vector.extract_strided_slice %1 {offsets = [0, 1], sizes = [16, 1], strides = [1, 1]} : vector<16x4xf32> to vector<16x1xf32>
    %45 = arith.subf %40, %31 : vector<1x256xf32>
    %46 = vector.broadcast %44 : vector<16x1xf32> to vector<16x256xf32>
    %47 = vector.broadcast %45 : vector<1x256xf32> to vector<16x256xf32>
    %48 = arith.mulf %46, %47 : vector<16x256xf32>
    %49 = vector.broadcast %31 : vector<1x256xf32> to vector<16x256xf32>
    %50 = arith.addf %49, %48 : vector<16x256xf32>
    %51 = vector.broadcast %44 : vector<16x1xf32> to vector<16x256xf32>
    %52 = vector.broadcast %43 : vector<1x256xf32> to vector<16x256xf32>
    %53 = arith.mulf %51, %52 : vector<16x256xf32>
    %54 = arith.mulf %24, %50 : vector<16x256xf32>
    %55 = arith.mulf %27, %53 : vector<16x256xf32>
    %56 = arith.subf %54, %55 : vector<16x256xf32>
    %57 = arith.mulf %24, %53 : vector<16x256xf32>
    %58 = arith.mulf %27, %50 : vector<16x256xf32>
    %59 = arith.addf %57, %58 : vector<16x256xf32>
    %60 = vector.extract_strided_slice %0 {offsets = [2, 0], sizes = [1, 256], strides = [1, 1]} : vector<4x256xf32> to vector<1x256xf32>
    %cst_12 = arith.constant 5.000000e-01 : f32
    %61 = vector.broadcast %cst_12 : f32 to vector<1x256xf32>
    %62 = arith.mulf %61, %60 : vector<1x256xf32>
    %63 = math.cos %62 : vector<1x256xf32>
    %cst_13 = arith.constant 5.000000e-01 : f32
    %64 = vector.broadcast %cst_13 : f32 to vector<1x256xf32>
    %65 = arith.mulf %64, %60 : vector<1x256xf32>
    %66 = math.sin %65 : vector<1x256xf32>
    %67 = arith.mulf %66, %66 : vector<1x256xf32>
    %cst_14 = arith.constant 2.000000e+00 : f32
    %68 = vector.broadcast %cst_14 : f32 to vector<1x256xf32>
    %69 = arith.mulf %68, %67 : vector<1x256xf32>
    %cst_15 = arith.constant 1.000000e+00 : f32
    %70 = vector.broadcast %cst_15 : f32 to vector<1x256xf32>
    %71 = arith.subf %70, %69 : vector<1x256xf32>
    %72 = arith.mulf %71, %66 : vector<1x256xf32>
    %cst_16 = arith.constant 2.000000e+00 : f32
    %73 = vector.broadcast %cst_16 : f32 to vector<1x256xf32>
    %74 = arith.mulf %73, %67 : vector<1x256xf32>
    %75 = arith.mulf %74, %63 : vector<1x256xf32>
    %76 = vector.extract_strided_slice %1 {offsets = [0, 2], sizes = [16, 1], strides = [1, 1]} : vector<16x4xf32> to vector<16x1xf32>
    %77 = arith.subf %72, %63 : vector<1x256xf32>
    %78 = vector.broadcast %76 : vector<16x1xf32> to vector<16x256xf32>
    %79 = vector.broadcast %77 : vector<1x256xf32> to vector<16x256xf32>
    %80 = arith.mulf %78, %79 : vector<16x256xf32>
    %81 = vector.broadcast %63 : vector<1x256xf32> to vector<16x256xf32>
    %82 = arith.addf %81, %80 : vector<16x256xf32>
    %83 = vector.broadcast %76 : vector<16x1xf32> to vector<16x256xf32>
    %84 = vector.broadcast %75 : vector<1x256xf32> to vector<16x256xf32>
    %85 = arith.mulf %83, %84 : vector<16x256xf32>
    %86 = arith.mulf %56, %82 : vector<16x256xf32>
    %87 = arith.mulf %59, %85 : vector<16x256xf32>
    %88 = arith.subf %86, %87 : vector<16x256xf32>
    %89 = arith.mulf %56, %85 : vector<16x256xf32>
    %90 = arith.mulf %59, %82 : vector<16x256xf32>
    %91 = arith.addf %89, %90 : vector<16x256xf32>
    %92 = vector.extract_strided_slice %0 {offsets = [3, 0], sizes = [1, 256], strides = [1, 1]} : vector<4x256xf32> to vector<1x256xf32>
    %cst_17 = arith.constant 5.000000e-01 : f32
    %93 = vector.broadcast %cst_17 : f32 to vector<1x256xf32>
    %94 = arith.mulf %93, %92 : vector<1x256xf32>
    %95 = math.cos %94 : vector<1x256xf32>
    %cst_18 = arith.constant 5.000000e-01 : f32
    %96 = vector.broadcast %cst_18 : f32 to vector<1x256xf32>
    %97 = arith.mulf %96, %92 : vector<1x256xf32>
    %98 = math.sin %97 : vector<1x256xf32>
    %99 = arith.mulf %98, %98 : vector<1x256xf32>
    %cst_19 = arith.constant 2.000000e+00 : f32
    %100 = vector.broadcast %cst_19 : f32 to vector<1x256xf32>
    %101 = arith.mulf %100, %99 : vector<1x256xf32>
    %cst_20 = arith.constant 1.000000e+00 : f32
    %102 = vector.broadcast %cst_20 : f32 to vector<1x256xf32>
    %103 = arith.subf %102, %101 : vector<1x256xf32>
    %104 = arith.mulf %103, %98 : vector<1x256xf32>
    %cst_21 = arith.constant 2.000000e+00 : f32
    %105 = vector.broadcast %cst_21 : f32 to vector<1x256xf32>
    %106 = arith.mulf %105, %99 : vector<1x256xf32>
    %107 = arith.mulf %106, %95 : vector<1x256xf32>
    %108 = vector.extract_strided_slice %1 {offsets = [0, 3], sizes = [16, 1], strides = [1, 1]} : vector<16x4xf32> to vector<16x1xf32>
    %109 = arith.subf %104, %95 : vector<1x256xf32>
    %110 = vector.broadcast %108 : vector<16x1xf32> to vector<16x256xf32>
    %111 = vector.broadcast %109 : vector<1x256xf32> to vector<16x256xf32>
    %112 = arith.mulf %110, %111 : vector<16x256xf32>
    %113 = vector.broadcast %95 : vector<1x256xf32> to vector<16x256xf32>
    %114 = arith.addf %113, %112 : vector<16x256xf32>
    %115 = vector.broadcast %108 : vector<16x1xf32> to vector<16x256xf32>
    %116 = vector.broadcast %107 : vector<1x256xf32> to vector<16x256xf32>
    %117 = arith.mulf %115, %116 : vector<16x256xf32>
    %118 = arith.mulf %88, %114 : vector<16x256xf32>
    %119 = arith.mulf %91, %117 : vector<16x256xf32>
    %120 = arith.subf %118, %119 : vector<16x256xf32>
    %121 = arith.mulf %88, %117 : vector<16x256xf32>
    %122 = arith.mulf %91, %114 : vector<16x256xf32>
    %123 = arith.addf %121, %122 : vector<16x256xf32>
    %124 = tpu.concatenate %120, %123 in 0 : vector<16x256xf32>, vector<16x256xf32> -> vector<32x256xf32>
    %c0_22 = arith.constant 0 : index
    %c0_23 = arith.constant 0 : index
    %125 = vector.load %arg2[%c0_22, %c0_23] : memref<32x32xf32, #tpu.memory_space<vmem>>, vector<32x32xf32>
    %cst_24 = arith.constant dense<0.000000e+00> : vector<32x256xf32>
    %126 = tpu.matmul %125, %124, %cst_24 {dimension_numbers = #tpu.dot_dimension_numbers<[1], [0], [0], [1], [0, 0, 1, 1], [], []>} : vector<32x32xf32>, vector<32x256xf32>, vector<32x256xf32> -> vector<32x256xf32>
    %127 = vector.extract_strided_slice %126 {offsets = [0, 0], sizes = [16, 256], strides = [1, 1]} : vector<32x256xf32> to vector<16x256xf32>
    %128 = vector.extract_strided_slice %126 {offsets = [16, 0], sizes = [16, 256], strides = [1, 1]} : vector<32x256xf32> to vector<16x256xf32>
    %129 = arith.mulf %127, %127 : vector<16x256xf32>
    %130 = arith.mulf %128, %128 : vector<16x256xf32>
    %131 = arith.addf %129, %130 : vector<16x256xf32>
    %c0_25 = arith.constant 0 : index
    %c0_26 = arith.constant 0 : index
    %132 = vector.load %arg3[%c0_25, %c0_26] : memref<4x16xf32, #tpu.memory_space<vmem>>, vector<4x16xf32>
    %cst_27 = arith.constant dense<0.000000e+00> : vector<4x256xf32>
    %133 = tpu.matmul %132, %131, %cst_27 {dimension_numbers = #tpu.dot_dimension_numbers<[1], [0], [0], [1], [0, 0, 1, 1], [], []>} : vector<4x16xf32>, vector<16x256xf32>, vector<4x256xf32> -> vector<4x256xf32>
    %c0_28 = arith.constant 0 : index
    %c0_29 = arith.constant 0 : index
    %134 = vector.load %arg5[%c0_28, %c0_29] : memref<4x256xf32, #tpu.memory_space<vmem>>, vector<4x256xf32>
    tpu.vector_store %arg5[%c0_28, %c0_29], %133 {strides = array<i32>} : memref<4x256xf32, #tpu.memory_space<vmem>>, vector<4x256xf32>,
    return
  }
  func.func @transform_0(%arg0: i32) -> (i32, i32) {
    %c0_i32 = arith.constant 0 : i32
    %c0_i32_0 = arith.constant 0 : i32
    return %c0_i32, %arg0 : i32, i32
  }
  func.func @transform_1(%arg0: i32) -> (i32, i32) {
    %c0_i32 = arith.constant 0 : i32
    %c0_i32_0 = arith.constant 0 : i32
    %c0_i32_1 = arith.constant 0 : i32
    return %c0_i32, %c0_i32_0 : i32, i32
  }
  func.func @transform_2(%arg0: i32) -> (i32, i32) {
    %c0_i32 = arith.constant 0 : i32
    %c0_i32_0 = arith.constant 0 : i32
    %c0_i32_1 = arith.constant 0 : i32
    return %c0_i32, %c0_i32_0 : i32, i32
  }
  func.func @transform_3(%arg0: i32) -> (i32, i32) {
    %c0_i32 = arith.constant 0 : i32
    %c0_i32_0 = arith.constant 0 : i32
    %c0_i32_1 = arith.constant 0 : i32
    return %c0_i32, %c0_i32_0 : i32, i32
  }
  func.func @transform_4(%arg0: i32) -> (i32, i32) {
    %c0_i32 = arith.constant 0 : i32
    %c0_i32_0 = arith.constant 0 : i32
    return %c0_i32, %arg0 : i32, i32
  }
}

</mosaic_0001>

<llo_original>
// kernel: tpu_custom_call.1
$region0: #{tpu_custom_call.1}
  #allocation0 [shape = 'u32[]', space=smem, size = 0x4, offset = 0x4, fixed_abs, tag = 'smem constant byte address 0x4 - core index']
  #allocation1 [shape = 'u32[144,128]{1,0:T(1,128)}', space=vmem, size = 0x12000, scoped, tag = 'internal scratch']
  %s0 = inlined_call_operand.vmem [shape: f32[4,256], index: 0, kind: input, shape index: {}]
  %s1 = inlined_call_operand.hbm [shape: f32[32,32], index: 1, kind: input, shape index: {}]
  %s2 = inlined_call_operand.vmem [shape: f32[4,16], index: 2, kind: input, shape index: {}]
  %s3 = inlined_call_operand.vmem [shape: f32[16,4], index: 3, kind: input, shape index: {}]
  %s4 = inlined_call_operand.hbm [shape: f32[4,256], index: 4, kind: output, shape index: {}]
  %s5 = sld [smem:[#allocation0]]
  $region30: #{tpu_custom_call.1} parent=0
    _
  %s7 = ssub.s32 1, %s5
  %s8 = scalar_select 0, %s7, %s5
  $region1: #{tpu_custom_call.1} parent=0
    #allocation2 [shape = 'u8[16384]{0}', space=vmem, size = 0x4000, scoped, tag = 'input window, operand 1, single buffered']
    #allocation3 [shape = 's32[1]{0}', space=sflag, size = 0x4, scoped, tag = 'scoped memory for tpu_custom_call.1']
    #allocation4 [shape = 's32[1]{0}', space=sflag, size = 0x4, scoped, tag = 'scoped memory for tpu_custom_call.1']
    #allocation5 [shape = 'u8[4096]{0}', space=vmem, size = 0x1000, scoped, tag = 'output window, operand 0, single buffered']
    %9 = vsyncpa [#allocation3], 0
    %10 = vsyncpa [#allocation4], 0
    // Predicated region
    $region2: #{tpu_custom_call.1} parent=1 // pred_check
      _
    $region3: #{tpu_custom_call.1} parent=1 // pred_check_branch
      %12 = sbr.rel (0) target = $region5
    $region4: #{tpu_custom_call.1} parent=1 // pred_region
      _
    $region5: #{tpu_custom_call.1} parent=1 // pred_fallthru
      _
    // Predicated region
    $region6: #{tpu_custom_call.1} parent=1 // pred_check
      _
    $region7: #{tpu_custom_call.1} parent=1 // pred_check_branch
      %14 = sbr.rel (0) target = $region9
    $region8: #{tpu_custom_call.1} parent=1 // pred_region
      %s16 = ssub.s32 512, 512
      %17 = vsyncadd [#allocation3], %s16
      %s18 = sshll.u32 [#allocation2], 4
      %s19 = int_to_ptr.vmem [resolvable:$true] %s18
      %24 = dma.hbm_to_vmem [thread:$0]  %s1, 512, %s19, [#allocation3], 128, 128, 8
    $region9: #{tpu_custom_call.1} parent=1 // pred_fallthru
      _
    // Predicated region
    $region10: #{tpu_custom_call.1} parent=1 // pred_check
      _
    $region11: #{tpu_custom_call.1} parent=1 // pred_check_branch
      %26 = sbr.rel (0) target = $region13
    $region12: #{tpu_custom_call.1} parent=1 // pred_region
      _
    $region13: #{tpu_custom_call.1} parent=1 // pred_fallthru
      _
    // Predicated region
    $region14: #{tpu_custom_call.1} parent=1 // pred_check
      _
    $region15: #{tpu_custom_call.1} parent=1 // pred_check_branch
      %28 = sbr.rel (0) target = $region17
    $region16: #{tpu_custom_call.1} parent=1 // pred_region
      _
    $region17: #{tpu_custom_call.1} parent=1 // pred_fallthru
      _
    // Predicated region
    $region18: #{tpu_custom_call.1} parent=1 // pred_check
      _
    $region19: #{tpu_custom_call.1} parent=1 // pred_check_branch
      %30 = sbr.rel (0) target = $region21
    $region20: #{tpu_custom_call.1} parent=1 // pred_region
      %31 = dma.done [#allocation3], 512
    $region21: #{tpu_custom_call.1} parent=1 // pred_fallthru
      _
    %v32 = vld [vmem:[%s0] sm:$0xff]
    %v33 = vld [vmem:[%s3] sm:$0xff]
    %v34 = vld [vmem:[%s3 + $0x8] sm:$0xff]
    %v35 = vmul.f32 %v32, 0.5
    %v36 = vand.u32 2147483647, %v35
    %vm37 = vcmp.le.f32.partialorder %v36, 0.7853982
    %vm38 = vcmp.lt.s32.totalorder %v35, 0
    %v39 = vand.u32 %v35, 2139095040
    %v40 = vshrl.u32 %v39, 23
    %v41 = vsub.s32 %v40, 127
    %v42 = vand.u32 2147483647, %v35
    %v43 = vand.u32 %v42, 8388607
    %v44 = vor.u32 %v43, 8388608
    %v45 = vsub.s32 0, %v44
    %v46 = vadd.s32 %v41, 1
    %vm47 = vcmp.gt.s32.totalorder %v46, 0
    %v48 = vsel %vm47, %v46, 0
    %v49 = vshrl.u32 %v48, 5
    %v50 = vand.u32 %v48, 31
    %v51 = vsub.s32 32, %v50
    %v52 = vshrl.u32 683565275, %v51
    %v53 = vshll.u32 683565275, %v50
    %v54 = vshrl.u32 2475754826, %v51
    %v55 = vor.u32 %v53, %v54
    %v56 = vshll.u32 2475754826, %v50
    %v57 = vshrl.u32 2131351028, %v51
    %v58 = vor.u32 %v56, %v57
    %v59 = vshll.u32 2131351028, %v50
    %v60 = vshrl.u32 2102212464, %v51
    %v61 = vor.u32 %v59, %v60
    %v62 = vshll.u32 2102212464, %v50
    %v63 = vshrl.u32 920167782, %v51
    %v64 = vor.u32 %v62, %v63
    %v65 = vshll.u32 920167782, %v50
    %v66 = vshrl.u32 1326507024, %v51
    %v67 = vor.u32 %v65, %v66
    %vm68 = vcmp.lt.s32.totalorder %v49, 1
    %vm69 = vcmp.lt.s32.totalorder %v49, 2
    %vm70 = vcmp.lt.s32.totalorder %v49, 3
    %vm71 = vcmp.lt.s32.totalorder %v49, 4
    %v72 = vsel %vm68, %v52, %v55
    %v73 = vsel %vm71, %v61, 2102212464
    %v74 = vsel %vm70, %v58, %v73
    %v75 = vsel %vm69, %v72, %v74
    %v76 = vsel %vm68, %v55, %v58
    %v77 = vsel %vm71, %v64, 920167782
    %v78 = vsel %vm70, %v61, %v77
    %v79 = vsel %vm69, %v76, %v78
    %v80 = vsel %vm68, %v58, %v61
    %v81 = vsel %vm71, %v67, 1326507024
    %v82 = vsel %vm70, %v64, %v81
    %v83 = vsel %vm69, %v80, %v82
    %v84 = vshll.u32 %v44, 8
    %v85 = vmul.u32.u64.compose %v84, %v83
    %v86 = vextract.low.u32 %v85
    %v87 = vextract.high.u32 %v85
    %v88 = vmul.u32.u64.compose %v84, %v79
    %v89 = vextract.low.u32 %v88
    %v90 = vextract.high.u32 %v88
    %v91 = vmul.u32 %v84, %v75
    %v92 = vadd.s32 %v87, %v89
    %vm93 = vc.u32 %v87, %v89
    %v94 = vadd.s32 %v90, 1
    %v95 = vsel %vm93, %v94, %v90
    %v96 = vadd.s32 %v91, %v95
    %v97 = vadd.s32 %v96, 536870912
    %v98 = vshrl.u32 %v97, 30
    %v99 = vshll.u32 %v98, 30
    %v100 = vsub.s32 %v96, %v99
    %vm101 = vcmp.lt.s32.totalorder %v100, 0
    %v102 = vsub.s32 0, %v100
    %v103 = vsel %vm101, %v102, %v100
    %v104 = vclz %v103
    %v105 = vsub.s32 %v104, 2
    %vm106 = vcmp.gt.s32.totalorder 0, %v105
    %v107 = vsel %vm106, 0, %v105
    %v108 = vsub.s32 32, %v107
    %v109 = vshll.u32 %v100, %v107
    %v110 = vshrl.u32 %v92, %v108
    %v111 = vor.u32 %v109, %v110
    %v112 = vsub.s32 4294967266, %v107
    %v113 = vadd.s32 %v112, 127
    %v114 = vshll.u32 %v113, 23
    %v115 = vor.u32 4788187, %v114
    %v116 = vand.u32 2147483647, %v115
    %v118 = vcvt.s32.f32 %v111
    %v119 = vmul.f32 %v118, %v116
    %v120 = vxor.u32 %v119, 2147483648
    %v121 = vsel %vm38, %v120, %v119
    %v122 = vsub.s32 4, %v98
    %v123 = vsel %vm38, %v122, %v98
    %v124 = vsel %vm37, %v35, %v121
    %v125 = vsel %vm37, 0, %v123
    %v126 = vcosq.f32.pop %v124
    %v127 = vsinq.f32.pop %v124
    %vm128 = vweird.f32 %v35
    %v129 = vand.u32 %v125, 3
    %vm130 = vcmp.lt.s32.totalorder %v129, 2
    %vm131 = vcmp.eq.s32.totalorder %v129, 0
    %v132 = vxor.u32 %v127, 2147483648
    %v133 = vsel %vm131, %v126, %v132
    %vm134 = vcmp.eq.s32.totalorder %v129, 2
    %v135 = vxor.u32 %v126, 2147483648
    %v136 = vsel %vm134, %v135, %v127
    %v137 = vsel %vm130, %v133, %v136
    %v138 = vsel %vm128, nan, %v137
    %v139 = vand.u32 2147483647, %v35
    %vm140 = vcmp.le.f32.partialorder %v139, 0.7853982
    %vm141 = vcmp.lt.s32.totalorder %v35, 0
    %v142 = vand.u32 %v35, 2139095040
    %v143 = vshrl.u32 %v142, 23
    %v144 = vsub.s32 %v143, 127
    %v145 = vand.u32 2147483647, %v35
    %v146 = vand.u32 %v145, 8388607
    %v147 = vor.u32 %v146, 8388608
    %v148 = vsub.s32 0, %v147
    %v149 = vadd.s32 %v144, 1
    %vm150 = vcmp.gt.s32.totalorder %v149, 0
    %v151 = vsel %vm150, %v149, 0
    %v152 = vshrl.u32 %v151, 5
    %v153 = vand.u32 %v151, 31
    %v154 = vsub.s32 32, %v153
    %v155 = vshrl.u32 683565275, %v154
    %v156 = vshll.u32 683565275, %v153
    %v157 = vshrl.u32 2475754826, %v154
    %v158 = vor.u32 %v156, %v157
    %v159 = vshll.u32 2475754826, %v153
    %v160 = vshrl.u32 2131351028, %v154
    %v161 = vor.u32 %v159, %v160
    %v162 = vshll.u32 2131351028, %v153
    %v163 = vshrl.u32 2102212464, %v154
    %v164 = vor.u32 %v162, %v163
    %v165 = vshll.u32 2102212464, %v153
    %v166 = vshrl.u32 920167782, %v154
    %v167 = vor.u32 %v165, %v166
    %v168 = vshll.u32 920167782, %v153
    %v169 = vshrl.u32 1326507024, %v154
    %v170 = vor.u32 %v168, %v169
    %vm171 = vcmp.lt.s32.totalorder %v152, 1
    %vm172 = vcmp.lt.s32.totalorder %v152, 2
    %vm173 = vcmp.lt.s32.totalorder %v152, 3
    %vm174 = vcmp.lt.s32.totalorder %v152, 4
    %v175 = vsel %vm171, %v155, %v158
    %v176 = vsel %vm174, %v164, 2102212464
    %v177 = vsel %vm173, %v161, %v176
    %v178 = vsel %vm172, %v175, %v177
    %v179 = vsel %vm171, %v158, %v161
    %v180 = vsel %vm174, %v167, 920167782
    %v181 = vsel %vm173, %v164, %v180
    %v182 = vsel %vm172, %v179, %v181
    %v183 = vsel %vm171, %v161, %v164
    %v184 = vsel %vm174, %v170, 1326507024
    %v185 = vsel %vm173, %v167, %v184
    %v186 = vsel %vm172, %v183, %v185
    %v187 = vshll.u32 %v147, 8
    %v188 = vmul.u32.u64.compose %v187, %v186
    %v189 = vextract.low.u32 %v188
    %v190 = vextract.high.u32 %v188
    %v191 = vmul.u32.u64.compose %v187, %v182
    %v192 = vextract.low.u32 %v191
    %v193 = vextract.high.u32 %v191
    %v194 = vmul.u32 %v187, %v178
    %v195 = vadd.s32 %v190, %v192
    %vm196 = vc.u32 %v190, %v192
    %v197 = vadd.s32 %v193, 1
    %v198 = vsel %vm196, %v197, %v193
    %v199 = vadd.s32 %v194, %v198
    %v200 = vadd.s32 %v199, 536870912
    %v201 = vshrl.u32 %v200, 30
    %v202 = vshll.u32 %v201, 30
    %v203 = vsub.s32 %v199, %v202
    %vm204 = vcmp.lt.s32.totalorder %v203, 0
    %v205 = vsub.s32 0, %v203
    %v206 = vsel %vm204, %v205, %v203
    %v207 = vclz %v206
    %v208 = vsub.s32 %v207, 2
    %vm209 = vcmp.gt.s32.totalorder 0, %v208
    %v210 = vsel %vm209, 0, %v208
    %v211 = vsub.s32 32, %v210
    %v212 = vshll.u32 %v203, %v210
    %v213 = vshrl.u32 %v195, %v211
    %v214 = vor.u32 %v212, %v213
    %v215 = vsub.s32 4294967266, %v210
    %v216 = vadd.s32 %v215, 127
    %v217 = vshll.u32 %v216, 23
    %v218 = vor.u32 4788187, %v217
    %v219 = vand.u32 2147483647, %v218
    %v221 = vcvt.s32.f32 %v214
    %v222 = vmul.f32 %v221, %v219
    %v223 = vxor.u32 %v222, 2147483648
    %v224 = vsel %vm141, %v223, %v222
    %v225 = vsub.s32 4, %v201
    %v226 = vsel %vm141, %v225, %v201
    %v227 = vsel %vm140, %v35, %v224
    %v228 = vsel %vm140, 0, %v226
    %v229 = vcosq.f32.pop %v227
    %v230 = vsinq.f32.pop %v227
    %vm231 = vweird.f32 %v35
    %v232 = vadd.s32 %v228, 3
    %v233 = vand.u32 %v232, 3
    %vm234 = vcmp.lt.s32.totalorder %v233, 2
    %vm235 = vcmp.eq.s32.totalorder %v233, 0
    %v236 = vxor.u32 %v230, 2147483648
    %v237 = vsel %vm235, %v229, %v236
    %vm238 = vcmp.eq.s32.totalorder %v233, 2
    %v239 = vxor.u32 %v229, 2147483648
    %v240 = vsel %vm238, %v239, %v230
    %v241 = vsel %vm234, %v237, %v240
    %v242 = vsel %vm231, nan, %v241
    %v243 = vmul.f32 %v242, %v242
    %v244 = vmul.f32 %v243, 2.0
    %v245 = vsub.f32 1.0, %v244
    %v246 = vmul.f32 %v245, %v242
    %v247 = vmul.f32 %v244, %v138
    %v248 = vsub.f32 %v246, %v138
    %250 = vset.pattern.permute.xlu0 0
    %251 = vperm.xlu0 %250, %v33
    %v252 = vpop.permute.xlu0 %251
    %255 = vset.pattern.permute.xlu0 0
    %256 = vperm.xlu0 %255, %v34
    %v257 = vpop.permute.xlu0 %256
    %v260 = vlaneseq
    %v261 = vshrl.u32 %v260, 7
    %v262 = vsub.s32 0, %v261
    %v263 = vrot.slane %v248, %v262
    %v264 = vlaneseq
    %v265 = vshrl.u32 %v264, 7
    %v266 = vsub.s32 4, %v265
    %v267 = vrot.slane %v248, %v266
    %v270 = vlaneseq
    %v271 = vshrl.u32 %v270, 7
    %v272 = vsub.s32 0, %v271
    %v273 = vrot.slane %v263, %v272
    %v274 = vlaneseq
    %v275 = vshrl.u32 %v274, 7
    %v276 = vsub.s32 0, %v275
    %v277 = vrot.slane %v267, %v276
    %v278 = vmul.f32 %v252, %v273
    %v279 = vmul.f32 %v252, %v277
    %v280 = vmul.f32 %v257, %v273
    %v281 = vmul.f32 %v257, %v277
    %v283 = vlaneseq
    %v284 = vshrl.u32 %v283, 7
    %v285 = vsub.s32 0, %v284
    %v286 = vrot.slane %v138, %v285
    %v287 = vlaneseq
    %v288 = vshrl.u32 %v287, 7
    %v289 = vsub.s32 4, %v288
    %v290 = vrot.slane %v138, %v289
    %v293 = vlaneseq
    %v294 = vshrl.u32 %v293, 7
    %v295 = vsub.s32 0, %v294
    %v296 = vrot.slane %v286, %v295
    %v297 = vlaneseq
    %v298 = vshrl.u32 %v297, 7
    %v299 = vsub.s32 0, %v298
    %v300 = vrot.slane %v290, %v299
    %v301 = vadd.f32 %v296, %v278
    %v302 = vadd.f32 %v300, %v279
    %v303 = vadd.f32 %v296, %v280
    %v304 = vadd.f32 %v300, %v281
    %v306 = vlaneseq
    %v307 = vshrl.u32 %v306, 7
    %v308 = vsub.s32 0, %v307
    %v309 = vrot.slane %v247, %v308
    %v310 = vlaneseq
    %v311 = vshrl.u32 %v310, 7
    %v312 = vsub.s32 4, %v311
    %v313 = vrot.slane %v247, %v312
    %v316 = vlaneseq
    %v317 = vshrl.u32 %v316, 7
    %v318 = vsub.s32 0, %v317
    %v319 = vrot.slane %v309, %v318
    %v320 = vlaneseq
    %v321 = vshrl.u32 %v320, 7
    %v322 = vsub.s32 0, %v321
    %v323 = vrot.slane %v313, %v322
    %v324 = vmul.f32 %v252, %v319
    %v325 = vmul.f32 %v252, %v323
    %v326 = vmul.f32 %v257, %v319
    %v327 = vmul.f32 %v257, %v323
    %328 = vset.pattern.permute.xlu0 1
    %329 = vperm.xlu0 %328, %v33
    %v330 = vpop.permute.xlu0 %329
    %332 = vset.pattern.permute.xlu0 1
    %333 = vperm.xlu0 %332, %v34
    %v334 = vpop.permute.xlu0 %333
    %v336 = vlaneseq
    %v337 = vshrl.u32 %v336, 7
    %v338 = vsub.s32 1, %v337
    %v339 = vrot.slane %v248, %v338
    %v340 = vlaneseq
    %v341 = vshrl.u32 %v340, 7
    %v342 = vsub.s32 5, %v341
    %v343 = vrot.slane %v248, %v342
    %v346 = vlaneseq
    %v347 = vshrl.u32 %v346, 7
    %v348 = vsub.s32 1, %v347
    %v349 = vrot.slane %v339, %v348
    %v350 = vlaneseq
    %v351 = vshrl.u32 %v350, 7
    %v352 = vsub.s32 1, %v351
    %v353 = vrot.slane %v343, %v352
    %v354 = vmul.f32 %v330, %v349
    %v355 = vmul.f32 %v330, %v353
    %v356 = vmul.f32 %v334, %v349
    %v357 = vmul.f32 %v334, %v353
    %v358 = vlaneseq
    %v359 = vshrl.u32 %v358, 7
    %v360 = vsub.s32 1, %v359
    %v361 = vrot.slane %v138, %v360
    %v362 = vlaneseq
    %v363 = vshrl.u32 %v362, 7
    %v364 = vsub.s32 5, %v363
    %v365 = vrot.slane %v138, %v364
    %v368 = vlaneseq
    %v369 = vshrl.u32 %v368, 7
    %v370 = vsub.s32 1, %v369
    %v371 = vrot.slane %v361, %v370
    %v372 = vlaneseq
    %v373 = vshrl.u32 %v372, 7
    %v374 = vsub.s32 1, %v373
    %v375 = vrot.slane %v365, %v374
    %v376 = vadd.f32 %v371, %v354
    %v377 = vadd.f32 %v375, %v355
    %v378 = vadd.f32 %v371, %v356
    %v379 = vadd.f32 %v375, %v357
    %v380 = vlaneseq
    %v381 = vshrl.u32 %v380, 7
    %v382 = vsub.s32 1, %v381
    %v383 = vrot.slane %v247, %v382
    %v384 = vlaneseq
    %v385 = vshrl.u32 %v384, 7
    %v386 = vsub.s32 5, %v385
    %v387 = vrot.slane %v247, %v386
    %v390 = vlaneseq
    %v391 = vshrl.u32 %v390, 7
    %v392 = vsub.s32 1, %v391
    %v393 = vrot.slane %v383, %v392
    %v394 = vlaneseq
    %v395 = vshrl.u32 %v394, 7
    %v396 = vsub.s32 1, %v395
    %v397 = vrot.slane %v387, %v396
    %v398 = vmul.f32 %v330, %v393
    %v399 = vmul.f32 %v330, %v397
    %v400 = vmul.f32 %v334, %v393
    %v401 = vmul.f32 %v334, %v397
    %v402 = vmul.f32 %v301, %v376
    %v403 = vmul.f32 %v302, %v377
    %v404 = vmul.f32 %v303, %v378
    %v405 = vmul.f32 %v304, %v379
    %v406 = vmul.f32 %v324, %v398
    %v407 = vmul.f32 %v325, %v399
    %v408 = vmul.f32 %v326, %v400
    %v409 = vmul.f32 %v327, %v401
    %v410 = vsub.f32 %v402, %v406
    %v411 = vsub.f32 %v403, %v407
    %v412 = vsub.f32 %v404, %v408
    %v413 = vsub.f32 %v405, %v409
    %v414 = vmul.f32 %v301, %v398
    %v415 = vmul.f32 %v302, %v399
    %v416 = vmul.f32 %v303, %v400
    %v417 = vmul.f32 %v304, %v401
    %v418 = vmul.f32 %v324, %v376
    %v419 = vmul.f32 %v325, %v377
    %v420 = vmul.f32 %v326, %v378
    %v421 = vmul.f32 %v327, %v379
    %v422 = vadd.f32 %v414, %v418
    %v423 = vadd.f32 %v415, %v419
    %v424 = vadd.f32 %v416, %v420
    %v425 = vadd.f32 %v417, %v421
    %426 = vset.pattern.permute.xlu0 2
    %427 = vperm.xlu0 %426, %v33
    %v428 = vpop.permute.xlu0 %427
    %430 = vset.pattern.permute.xlu0 2
    %431 = vperm.xlu0 %430, %v34
    %v432 = vpop.permute.xlu0 %431
    %v434 = vlaneseq
    %v435 = vshrl.u32 %v434, 7
    %v436 = vsub.s32 2, %v435
    %v437 = vrot.slane %v248, %v436
    %v438 = vlaneseq
    %v439 = vshrl.u32 %v438, 7
    %v440 = vsub.s32 6, %v439
    %v441 = vrot.slane %v248, %v440
    %v444 = vlaneseq
    %v445 = vshrl.u32 %v444, 7
    %v446 = vsub.s32 2, %v445
    %v447 = vrot.slane %v437, %v446
    %v448 = vlaneseq
    %v449 = vshrl.u32 %v448, 7
    %v450 = vsub.s32 2, %v449
    %v451 = vrot.slane %v441, %v450
    %v452 = vmul.f32 %v428, %v447
    %v453 = vmul.f32 %v428, %v451
    %v454 = vmul.f32 %v432, %v447
    %v455 = vmul.f32 %v432, %v451
    %v456 = vlaneseq
    %v457 = vshrl.u32 %v456, 7
    %v458 = vsub.s32 2, %v457
    %v459 = vrot.slane %v138, %v458
    %v460 = vlaneseq
    %v461 = vshrl.u32 %v460, 7
    %v462 = vsub.s32 6, %v461
    %v463 = vrot.slane %v138, %v462
    %v466 = vlaneseq
    %v467 = vshrl.u32 %v466, 7
    %v468 = vsub.s32 2, %v467
    %v469 = vrot.slane %v459, %v468
    %v470 = vlaneseq
    %v471 = vshrl.u32 %v470, 7
    %v472 = vsub.s32 2, %v471
    %v473 = vrot.slane %v463, %v472
    %v474 = vadd.f32 %v469, %v452
    %v475 = vadd.f32 %v473, %v453
    %v476 = vadd.f32 %v469, %v454
    %v477 = vadd.f32 %v473, %v455
    %v478 = vlaneseq
    %v479 = vshrl.u32 %v478, 7
    %v480 = vsub.s32 2, %v479
    %v481 = vrot.slane %v247, %v480
    %v482 = vlaneseq
    %v483 = vshrl.u32 %v482, 7
    %v484 = vsub.s32 6, %v483
    %v485 = vrot.slane %v247, %v484
    %v488 = vlaneseq
    %v489 = vshrl.u32 %v488, 7
    %v490 = vsub.s32 2, %v489
    %v491 = vrot.slane %v481, %v490
    %v492 = vlaneseq
    %v493 = vshrl.u32 %v492, 7
    %v494 = vsub.s32 2, %v493
    %v495 = vrot.slane %v485, %v494
    %v496 = vmul.f32 %v428, %v491
    %v497 = vmul.f32 %v428, %v495
    %v498 = vmul.f32 %v432, %v491
    %v499 = vmul.f32 %v432, %v495
    %v500 = vmul.f32 %v410, %v474
    %v501 = vmul.f32 %v411, %v475
    %v502 = vmul.f32 %v412, %v476
    %v503 = vmul.f32 %v413, %v477
    %v504 = vmul.f32 %v422, %v496
    %v505 = vmul.f32 %v423, %v497
    %v506 = vmul.f32 %v424, %v498
    %v507 = vmul.f32 %v425, %v499
    %v508 = vsub.f32 %v500, %v504
    %v509 = vsub.f32 %v501, %v505
    %v510 = vsub.f32 %v502, %v506
    %v511 = vsub.f32 %v503, %v507
    %v512 = vmul.f32 %v410, %v496
    %v513 = vmul.f32 %v411, %v497
    %v514 = vmul.f32 %v412, %v498
    %v515 = vmul.f32 %v413, %v499
    %v516 = vmul.f32 %v422, %v474
    %v517 = vmul.f32 %v423, %v475
    %v518 = vmul.f32 %v424, %v476
    %v519 = vmul.f32 %v425, %v477
    %v520 = vadd.f32 %v512, %v516
    %v521 = vadd.f32 %v513, %v517
    %v522 = vadd.f32 %v514, %v518
    %v523 = vadd.f32 %v515, %v519
    %524 = vset.pattern.permute.xlu0 3
    %525 = vperm.xlu0 %524, %v33
    %v526 = vpop.permute.xlu0 %525
    %528 = vset.pattern.permute.xlu0 3
    %529 = vperm.xlu0 %528, %v34
    %v530 = vpop.permute.xlu0 %529
    %v532 = vlaneseq
    %v533 = vshrl.u32 %v532, 7
    %v534 = vsub.s32 3, %v533
    %v535 = vrot.slane %v248, %v534
    %v536 = vlaneseq
    %v537 = vshrl.u32 %v536, 7
    %v538 = vsub.s32 7, %v537
    %v539 = vrot.slane %v248, %v538
    %v542 = vlaneseq
    %v543 = vshrl.u32 %v542, 7
    %v544 = vsub.s32 3, %v543
    %v545 = vrot.slane %v535, %v544
    %v546 = vlaneseq
    %v547 = vshrl.u32 %v546, 7
    %v548 = vsub.s32 3, %v547
    %v549 = vrot.slane %v539, %v548
    %v550 = vmul.f32 %v526, %v545
    %v551 = vmul.f32 %v526, %v549
    %v552 = vmul.f32 %v530, %v545
    %v553 = vmul.f32 %v530, %v549
    %v554 = vlaneseq
    %v555 = vshrl.u32 %v554, 7
    %v556 = vsub.s32 3, %v555
    %v557 = vrot.slane %v138, %v556
    %v558 = vlaneseq
    %v559 = vshrl.u32 %v558, 7
    %v560 = vsub.s32 7, %v559
    %v561 = vrot.slane %v138, %v560
    %v564 = vlaneseq
    %v565 = vshrl.u32 %v564, 7
    %v566 = vsub.s32 3, %v565
    %v567 = vrot.slane %v557, %v566
    %v568 = vlaneseq
    %v569 = vshrl.u32 %v568, 7
    %v570 = vsub.s32 3, %v569
    %v571 = vrot.slane %v561, %v570
    %v572 = vadd.f32 %v567, %v550
    %v573 = vadd.f32 %v571, %v551
    %v574 = vadd.f32 %v567, %v552
    %v575 = vadd.f32 %v571, %v553
    %v576 = vlaneseq
    %v577 = vshrl.u32 %v576, 7
    %v578 = vsub.s32 3, %v577
    %v579 = vrot.slane %v247, %v578
    %v580 = vlaneseq
    %v581 = vshrl.u32 %v580, 7
    %v582 = vsub.s32 7, %v581
    %v583 = vrot.slane %v247, %v582
    %v586 = vlaneseq
    %v587 = vshrl.u32 %v586, 7
    %v588 = vsub.s32 3, %v587
    %v589 = vrot.slane %v579, %v588
    %v590 = vlaneseq
    %v591 = vshrl.u32 %v590, 7
    %v592 = vsub.s32 3, %v591
    %v593 = vrot.slane %v583, %v592
    %v594 = vmul.f32 %v526, %v589
    %v595 = vmul.f32 %v526, %v593
    %v596 = vmul.f32 %v530, %v589
    %v597 = vmul.f32 %v530, %v593
    %v598 = vmul.f32 %v508, %v572
    %v599 = vmul.f32 %v509, %v573
    %v600 = vmul.f32 %v510, %v574
    %v601 = vmul.f32 %v511, %v575
    %v602 = vmul.f32 %v520, %v594
    %v603 = vmul.f32 %v521, %v595
    %v604 = vmul.f32 %v522, %v596
    %v605 = vmul.f32 %v523, %v597
    %v606 = vsub.f32 %v598, %v602
    %v607 = vsub.f32 %v599, %v603
    %v608 = vsub.f32 %v600, %v604
    %v609 = vsub.f32 %v601, %v605
    %v610 = vmul.f32 %v508, %v594
    %v611 = vmul.f32 %v509, %v595
    %v612 = vmul.f32 %v510, %v596
    %v613 = vmul.f32 %v511, %v597
    %v614 = vmul.f32 %v520, %v572
    %v615 = vmul.f32 %v521, %v573
    %v616 = vmul.f32 %v522, %v574
    %v617 = vmul.f32 %v523, %v575
    %v618 = vadd.f32 %v610, %v614
    %v619 = vadd.f32 %v611, %v615
    %v620 = vadd.f32 %v612, %v616
    %v621 = vadd.f32 %v613, %v617
    %v622 = vld [vmem:[#allocation2] sm:$0xff]
    %v623 = vld [vmem:[#allocation2 + $0x8] sm:$0xff]
    %v624 = vld [vmem:[#allocation2 + $0x10] sm:$0xff]
    %v625 = vld [vmem:[#allocation2 + $0x18] sm:$0xff]
    %vm626 = vcmask 261120
    %v628 = vsel %vm626, %v622, 0
    %v631 = vsel %vm626, %v623, 0
    %v634 = vsel %vm626, %v624, 0
    %v637 = vsel %vm626, %v625, 0
    %639 = vmatprep.subr.mxu0 0.0
    %640 = vmatpush1.msra.mxu0 0.0
    %641 = vmatprep.subr.mxu0 0.0
    %642 = vmatpush1.msra.mxu0 0.0
    %643 = vmatprep.subr.mxu0 0.0
    %644 = vmatpush1.msra.mxu0 0.0
    %645 = vmatprep.subr.mxu0 0.0
    %646 = vmatpush1.msra.mxu0 0.0
    %647 = vmatprep.subr.mxu0 0.0
    %648 = vmatpush1.msra.mxu0 0.0
    %649 = vmatprep.subr.mxu0 0.0
    %650 = vmatpush1.msra.mxu0 0.0
    %651 = vmatprep.subr.mxu0 0.0
    %652 = vmatpush1.msra.mxu0 0.0
    %653 = vmatprep.subr.mxu0 0.0
    %654 = vmatpush1.msra.mxu0 0.0
    %655 = vmatprep.subr.mxu0 0.0
    %656 = vmatpush1.msra.mxu0 0.0
    %657 = vmatprep.subr.mxu0 0.0
    %658 = vmatpush1.msra.mxu0 0.0
    %659 = vmatprep.subr.mxu0 0.0
    %660 = vmatpush1.msra.mxu0 0.0
    %661 = vmatprep.subr.mxu0 0.0
    %662 = vmatpush1.msra.mxu0 0.0
    %663 = vmatprep.subr.mxu0 %v621
    %664 = vmatpush1.msra.mxu0 %v620
    %665 = vmatprep.subr.mxu0 %v619
    %666 = vmatpush1.msra.mxu0 %v618
    %667 = vmatprep.subr.mxu0 %v609
    %668 = vmatpush1.msra.mxu0 %v608
    %669 = vmatprep.subr.mxu0 %v607
    %670 = vmatpush1.msra.mxu0 %v606
    %671 = vmatprep.subr.mxu0 0.0
    %672 = vmatpush2.msra.mxu0 0.0
    %673 = vmatprep.subr.mxu0 0.0
    %674 = vmatpush2.msra.mxu0 0.0
    %675 = vmatprep.subr.mxu0 0.0
    %676 = vmatpush2.msra.mxu0 0.0
    %677 = vmatprep.subr.mxu0 0.0
    %678 = vmatpush2.msra.mxu0 0.0
    %679 = vmatprep.subr.mxu0 0.0
    %680 = vmatpush2.msra.mxu0 0.0
    %681 = vmatprep.subr.mxu0 0.0
    %682 = vmatpush2.msra.mxu0 0.0
    %683 = vmatprep.subr.mxu0 0.0
    %684 = vmatpush2.msra.mxu0 0.0
    %685 = vmatprep.subr.mxu0 0.0
    %686 = vmatpush2.msra.mxu0 0.0
    %687 = vmatprep.subr.mxu0 0.0
    %688 = vmatpush2.msra.mxu0 0.0
    %689 = vmatprep.subr.mxu0 0.0
    %690 = vmatpush2.msra.mxu0 0.0
    %691 = vmatprep.subr.mxu0 0.0
    %692 = vmatpush2.msra.mxu0 0.0
    %693 = vmatprep.subr.mxu0 0.0
    %694 = vmatpush2.msra.mxu0 0.0
    %695 = vmatprep.subr.mxu0 0.0
    %696 = vmatpush2.msra.mxu0 0.0
    %697 = vmatprep.subr.mxu0 0.0
    %698 = vmatpush2.msra.mxu0 0.0
    %699 = vmatprep.subr.mxu0 0.0
    %700 = vmatpush2.msra.mxu0 0.0
    %701 = vmatprep.subr.mxu0 0.0
    %702 = vmatpush2.msra.mxu0 0.0
    %703 = vmatprep.mubr.f32.mxu0 0.0
    %704 = vmatmul.mubr.f32.gmra.mxu0 %v628
    %v705 = vpop.f32.mrf.mxu0
    %v706 = vadd.f32 0.0, %v705
    %v707 = vpop.f32.mrf.mxu0
    %v708 = vadd.f32 0.0, %v707
    %709 = vmatprep.mubr.f32.mxu0 0.0
    %710 = vmatmul.mubr.f32.gmra.mxu0 %v631
    %v711 = vpop.f32.mrf.mxu0
    %v712 = vadd.f32 0.0, %v711
    %v713 = vpop.f32.mrf.mxu0
    %v714 = vadd.f32 0.0, %v713
    %715 = vmatprep.mubr.f32.mxu0 0.0
    %716 = vmatmul.mubr.f32.gmra.mxu0 %v634
    %v717 = vpop.f32.mrf.mxu0
    %v718 = vadd.f32 0.0, %v717
    %v719 = vpop.f32.mrf.mxu0
    %v720 = vadd.f32 0.0, %v719
    %721 = vmatprep.mubr.f32.mxu0 0.0
    %722 = vmatmul.mubr.f32.gmra.mxu0 %v637
    %v723 = vpop.f32.mrf.mxu0
    %v724 = vadd.f32 0.0, %v723
    %v725 = vpop.f32.mrf.mxu0
    %v726 = vadd.f32 0.0, %v725
    %727 = vdwg.mxu0
    %v728 = vmul.f32 %v706, %v706
    %v729 = vmul.f32 %v708, %v708
    %v730 = vmul.f32 %v712, %v712
    %v731 = vmul.f32 %v714, %v714
    %v732 = vmul.f32 %v718, %v718
    %v733 = vmul.f32 %v720, %v720
    %v734 = vmul.f32 %v724, %v724
    %v735 = vmul.f32 %v726, %v726
    %v736 = vadd.f32 %v728, %v732
    %v737 = vadd.f32 %v729, %v733
    %v738 = vadd.f32 %v730, %v734
    %v739 = vadd.f32 %v731, %v735
    %v740 = vld [vmem:[%s2] sm:$0xf]
    %vm741 = vcmask 130048
    %v743 = vsel %vm741, %v740, 0
    %745 = vmatprep.subr.mxu0 0.0
    %746 = vmatpush1.msra.mxu0 0.0
    %747 = vmatprep.subr.mxu0 0.0
    %748 = vmatpush1.msra.mxu0 0.0
    %749 = vmatprep.subr.mxu0 0.0
    %750 = vmatpush1.msra.mxu0 0.0
    %751 = vmatprep.subr.mxu0 0.0
    %752 = vmatpush1.msra.mxu0 0.0
    %753 = vmatprep.subr.mxu0 0.0
    %754 = vmatpush1.msra.mxu0 0.0
    %755 = vmatprep.subr.mxu0 0.0
    %756 = vmatpush1.msra.mxu0 0.0
    %757 = vmatprep.subr.mxu0 0.0
    %758 = vmatpush1.msra.mxu0 0.0
    %759 = vmatprep.subr.mxu0 0.0
    %760 = vmatpush1.msra.mxu0 0.0
    %761 = vmatprep.subr.mxu0 0.0
    %762 = vmatpush1.msra.mxu0 0.0
    %763 = vmatprep.subr.mxu0 0.0
    %764 = vmatpush1.msra.mxu0 0.0
    %765 = vmatprep.subr.mxu0 0.0
    %766 = vmatpush1.msra.mxu0 0.0
    %767 = vmatprep.subr.mxu0 0.0
    %768 = vmatpush1.msra.mxu0 0.0
    %769 = vmatprep.subr.mxu0 0.0
    %770 = vmatpush1.msra.mxu0 0.0
    %771 = vmatprep.subr.mxu0 0.0
    %772 = vmatpush1.msra.mxu0 0.0
    %773 = vmatprep.subr.mxu0 %v739
    %774 = vmatpush1.msra.mxu0 %v738
    %775 = vmatprep.subr.mxu0 %v737
    %776 = vmatpush1.msra.mxu0 %v736
    %777 = vmatprep.subr.mxu0 0.0
    %778 = vmatpush2.msra.mxu0 0.0
    %779 = vmatprep.subr.mxu0 0.0
    %780 = vmatpush2.msra.mxu0 0.0
    %781 = vmatprep.subr.mxu0 0.0
    %782 = vmatpush2.msra.mxu0 0.0
    %783 = vmatprep.subr.mxu0 0.0
    %784 = vmatpush2.msra.mxu0 0.0
    %785 = vmatprep.subr.mxu0 0.0
    %786 = vmatpush2.msra.mxu0 0.0
    %787 = vmatprep.subr.mxu0 0.0
    %788 = vmatpush2.msra.mxu0 0.0
    %789 = vmatprep.subr.mxu0 0.0
    %790 = vmatpush2.msra.mxu0 0.0
    %791 = vmatprep.subr.mxu0 0.0
    %792 = vmatpush2.msra.mxu0 0.0
    %793 = vmatprep.subr.mxu0 0.0
    %794 = vmatpush2.msra.mxu0 0.0
    %795 = vmatprep.subr.mxu0 0.0
    %796 = vmatpush2.msra.mxu0 0.0
    %797 = vmatprep.subr.mxu0 0.0
    %798 = vmatpush2.msra.mxu0 0.0
    %799 = vmatprep.subr.mxu0 0.0
    %800 = vmatpush2.msra.mxu0 0.0
    %801 = vmatprep.subr.mxu0 0.0
    %802 = vmatpush2.msra.mxu0 0.0
    %803 = vmatprep.subr.mxu0 0.0
    %804 = vmatpush2.msra.mxu0 0.0
    %805 = vmatprep.subr.mxu0 0.0
    %806 = vmatpush2.msra.mxu0 0.0
    %807 = vmatprep.subr.mxu0 0.0
    %808 = vmatpush2.msra.mxu0 0.0
    %809 = vmatprep.mubr.f32.mxu0 0.0
    %810 = vmatmul.mubr.f32.gmra.mxu0 %v743
    %v811 = vpop.f32.mrf.mxu0
    %v812 = vadd.f32 0.0, %v811
    %v813 = vpop.f32.mrf.mxu0
    %v814 = vadd.f32 0.0, %v813
    %815 = vdwg.mxu0
    %v818 = vcombine.low %v812, %v814
    %820 = vst [vmem:[#allocation5] sm:$0xff] %v818
    // Predicated region
    $region22: #{tpu_custom_call.1} parent=1 // pred_check
      _
    $region23: #{tpu_custom_call.1} parent=1 // pred_check_branch
      %822 = sbr.rel (0) target = $region25
    $region24: #{tpu_custom_call.1} parent=1 // pred_region
      %s824 = ssub.s32 128, 128
      %825 = vsyncadd [#allocation4], %s824
      %s827 = sshll.u32 [#allocation5], 4
      %s828 = int_to_ptr.vmem [resolvable:$true] %s827
      %830 = dma.vmem_to_hbm [thread:$0]  %s828, 128, %s4, [#allocation4]
    $region25: #{tpu_custom_call.1} parent=1 // pred_fallthru
      _
    // Predicated region
    $region26: #{tpu_custom_call.1} parent=1 // pred_check
      _
    $region27: #{tpu_custom_call.1} parent=1 // pred_check_branch
      %832 = sbr.rel (0) target = $region29
    $region28: #{tpu_custom_call.1} parent=1 // pred_region
      %833 = dma.done [#allocation4], 128
    $region29: #{tpu_custom_call.1} parent=1 // pred_fallthru
      _
    %834 = vsyncpa [#allocation3], 1
    %835 = vsyncpa [#allocation4], 1

</llo_original>
